<compile_context>
chip_gen: v5e
topology: v5e:2x2
jax: 0.10.0
libtpu: 0.0.40
codegen_flags: <defaults>
</compile_context>

<pallas_src>
import functools

import jax
import jax.numpy as jnp
from jax.experimental import pallas as pl
from jax.experimental.pallas import tpu as pltpu

LANE = 128
MAX_SINGLE_ROWS = 2048   # <= 1 MiB per f32 input -> do it in one kernel step
TILE_ROWS = 512          # block rows for the tiled (large-N) path


def _bce_elem(x, t):
    # Module semantics: s = sigmoid(x); loss = BCEWithLogits(s, t).
    # Stable BCE-with-logits on logits s is max(s,0) - s*t + log1p(exp(-|s|));
    # since s in (0,1): max(s,0) == s and |s| == s.
    s = jax.nn.sigmoid(x)
    return s * (1.0 - t) + jnp.log1p(jnp.exp(-s))


def _bce_single_kernel(x_ref, t_ref, o_ref, *, inv_n, n_valid, n_total):
    """Whole problem in one block: no grid loop, no accumulator."""
    x = x_ref[...].astype(jnp.float32)
    t = t_ref[...].astype(jnp.float32)
    loss = _bce_elem(x, t)
    if n_valid != n_total:  # static: only emitted when the tail was padded
        idx = (jax.lax.broadcasted_iota(jnp.int32, loss.shape, 0) * LANE
               + jax.lax.broadcasted_iota(jnp.int32, loss.shape, 1))
        loss = jnp.where(idx < n_valid, loss, 0.0)
    o_ref[...] = (jnp.sum(loss) * inv_n).reshape(1, 1)


def _bce_tiled_kernel(x_ref, t_ref, o_ref, acc_ref, *,
                      inv_n, n_valid, n_total, block_rows):
    """Large-N path: vector-shaped VMEM accumulator, single final reduce."""
    i = pl.program_id(0)

    @pl.when(i == 0)
    def _():
        acc_ref[...] = jnp.zeros_like(acc_ref)

    x = x_ref[...].astype(jnp.float32)
    t = t_ref[...].astype(jnp.float32)
    loss = _bce_elem(x, t)
    if n_valid != n_total:  # static: mask code only exists if padding exists
        base = i * (block_rows * LANE)
        idx = (base
               + jax.lax.broadcasted_iota(jnp.int32, loss.shape, 0) * LANE
               + jax.lax.broadcasted_iota(jnp.int32, loss.shape, 1))
        loss = jnp.where(idx < n_valid, loss, 0.0)

    acc_ref[...] += loss  # pure VPU adds; no per-step cross-lane reduce

    @pl.when(i == pl.num_programs(0) - 1)
    def _():
        o_ref[...] = (jnp.sum(acc_ref[...]) * inv_n).reshape(1, 1)


def bce_loss(inputs, targets):
    """inputs/targets: matching shapes; returns scalar mean BCE."""
    n = inputs.size
    x = inputs.reshape(-1)
    t = targets.reshape(-1)

    rows = -(-n // LANE)
    if rows <= MAX_SINGLE_ROWS:
        pad_rows = rows
    else:
        pad_rows = -(-rows // TILE_ROWS) * TILE_ROWS
    n_total = pad_rows * LANE

    if n_total != n:
        # Minimal ragged-tail pad only (never taken for the demo shape);
        # padded elements are zeroed inside the kernel via the iota mask.
        x = jnp.pad(x, (0, n_total - n))
        t = jnp.pad(t, (0, n_total - n))

    x2 = x.reshape(pad_rows, LANE)
    t2 = t.reshape(pad_rows, LANE)
    inv_n = 1.0 / float(n)

    if pad_rows <= MAX_SINGLE_ROWS:
        kernel = functools.partial(
            _bce_single_kernel, inv_n=inv_n, n_valid=n, n_total=n_total)
        out = pl.pallas_call(
            kernel,
            out_shape=jax.ShapeDtypeStruct((1, 1), jnp.float32),
            grid=(1,),
            in_specs=[pl.BlockSpec((pad_rows, LANE), lambda i: (0, 0)),
                      pl.BlockSpec((pad_rows, LANE), lambda i: (0, 0))],
            out_specs=pl.BlockSpec((1, 1), lambda i: (0, 0)),
        )(x2, t2)
    else:
        # TODO(synk): on v7x, add a leading size-2 "parallel" grid axis to
        # split the row range across both TensorCores and sum two partials.
        kernel = functools.partial(
            _bce_tiled_kernel, inv_n=inv_n, n_valid=n, n_total=n_total,
            block_rows=TILE_ROWS)
        out = pl.pallas_call(
            kernel,
            out_shape=jax.ShapeDtypeStruct((1, 1), jnp.float32),
            grid=(pad_rows // TILE_ROWS,),
            in_specs=[pl.BlockSpec((TILE_ROWS, LANE), lambda i: (i, 0)),
                      pl.BlockSpec((TILE_ROWS, LANE), lambda i: (i, 0))],
            out_specs=pl.BlockSpec((1, 1), lambda i: (0, 0)),
            scratch_shapes=[pltpu.VMEM((TILE_ROWS, LANE), jnp.float32)],
            compiler_params=pltpu.CompilerParams(
                dimension_semantics=("arbitrary",)),
        )(x2, t2)

    return out[0, 0]


def _bce_ref(inputs, targets):
    # Pure-JAX reference mirroring the torch module exactly:
    # BCEWithLogits(sigmoid(x), t), mean reduction.
    s = jax.nn.sigmoid(inputs.reshape(-1).astype(jnp.float32))
    t = targets.reshape(-1).astype(jnp.float32)
    loss = jnp.maximum(s, 0.0) - s * t + jnp.log1p(jnp.exp(-jnp.abs(s)))
    return jnp.mean(loss)


if __name__ == "__main__":
    key = jax.random.PRNGKey(0)
    k1, k2 = jax.random.split(key)
    # NCHW: batch=2, channels=4, spatial=16x16
    inputs = jax.random.normal(k1, (2, 4, 16, 16), dtype=jnp.float32)
    targets = (jax.random.uniform(k2, (2, 4, 16, 16)) > 0.5).astype(jnp.float32)

    out = bce_loss(inputs, targets)
    out = jax.block_until_ready(out)

    ref = _bce_ref(inputs, targets)
    assert jnp.allclose(out, ref, atol=1e-5, rtol=1e-5), (out, ref)
    print("KERNEL_OK")
</pallas_src>

<mosaic_0001>
module attributes {stable_mosaic.version = 11 : i64} {
  func.func @_bce_single_kernel(%arg0: i32, %arg1: memref<16x128xf32, #tpu.memory_space<vmem>>, %arg2: memref<16x128xf32, #tpu.memory_space<vmem>>, %arg3: memref<1x1xf32, #tpu.memory_space<vmem>>) attributes {dimension_semantics = [#tpu.dimension_semantics<arbitrary>], iteration_bounds = array<i64: 1>, scalar_prefetch = 0 : i64, scratch_operands = 0 : i64, tpu.core_type = #tpu.core_type<tc>, window_params = [{pipeline_mode = #tpu.pipeline_mode<synchronous>, transform_indices = @transform_0, window_bounds = array<i64: 16, 128>}, {pipeline_mode = #tpu.pipeline_mode<synchronous>, transform_indices = @transform_1, window_bounds = array<i64: 16, 128>}, {pipeline_mode = #tpu.pipeline_mode<synchronous>, transform_indices = @transform_2, window_bounds = array<i64: 1, 1>}]} {
    %c0 = arith.constant 0 : index
    %c0_0 = arith.constant 0 : index
    %0 = vector.load %arg1[%c0, %c0_0] : memref<16x128xf32, #tpu.memory_space<vmem>>, vector<16x128xf32>
    %c0_1 = arith.constant 0 : index
    %c0_2 = arith.constant 0 : index
    %1 = vector.load %arg2[%c0_1, %c0_2] : memref<16x128xf32, #tpu.memory_space<vmem>>, vector<16x128xf32>
    %2 = arith.negf %0 : vector<16x128xf32>
    %3 = math.exp %2 : vector<16x128xf32>
    %cst = arith.constant 1.000000e+00 : f32
    %4 = vector.broadcast %cst : f32 to vector<16x128xf32>
    %5 = arith.addf %4, %3 : vector<16x128xf32>
    %6 = arith.divf %4, %5 : vector<16x128xf32>
    %cst_3 = arith.constant 1.000000e+00 : f32
    %7 = vector.broadcast %cst_3 : f32 to vector<16x128xf32>
    %8 = arith.subf %7, %1 : vector<16x128xf32>
    %9 = arith.mulf %6, %8 : vector<16x128xf32>
    %cst_4 = arith.constant 0.000000e+00 : f32
    %10 = vector.broadcast %cst_4 : f32 to vector<16x128xf32>
    %11 = arith.subf %10, %6 : vector<16x128xf32>
    %12 = math.exp %11 : vector<16x128xf32>
    %13 = math.log1p %12 : vector<16x128xf32>
    %14 = arith.addf %9, %13 : vector<16x128xf32>
    %15 = vector.shape_cast %14 : vector<16x128xf32> to vector<1x16x128xf32>
    %cst_5 = arith.constant dense<0.000000e+00> : vector<1xf32>
    %16 = vector.multi_reduction <add>, %15, %cst_5 [1, 2] : vector<1x16x128xf32> to vector<1xf32>
    %17 = vector.shape_cast %16 : vector<1xf32> to vector<1x1x1xf32>
    %18 = vector.extract %17[0, 0, 0] : f32 from vector<1x1x1xf32>
    %cst_6 = arith.constant 4.8828125E-4 : f32
    %19 = arith.mulf %18, %cst_6 : f32
    %20 = vector.broadcast %19 : f32 to vector<1x1xf32>
    %c0_7 = arith.constant 0 : index
    %c0_8 = arith.constant 0 : index
    %21 = vector.load %arg3[%c0_7, %c0_8] : memref<1x1xf32, #tpu.memory_space<vmem>>, vector<1x1xf32>
    tpu.vector_store %arg3[%c0_7, %c0_8], %20 {strides = array<i32>} : memref<1x1xf32, #tpu.memory_space<vmem>>, vector<1x1xf32>,
    return
  }
  func.func @transform_0(%arg0: i32) -> (i32, i32) {
    %c0_i32 = arith.constant 0 : i32
    %c0_i32_0 = arith.constant 0 : i32
    %c0_i32_1 = arith.constant 0 : i32
    return %c0_i32, %c0_i32_0 : i32, i32
  }
  func.func @transform_1(%arg0: i32) -> (i32, i32) {
    %c0_i32 = arith.constant 0 : i32
    %c0_i32_0 = arith.constant 0 : i32
    %c0_i32_1 = arith.constant 0 : i32
    return %c0_i32, %c0_i32_0 : i32, i32
  }
  func.func @transform_2(%arg0: i32) -> (i32, i32) {
    %c0_i32 = arith.constant 0 : i32
    %c0_i32_0 = arith.constant 0 : i32
    %c0_i32_1 = arith.constant 0 : i32
    return %c0_i32, %c0_i32_0 : i32, i32
  }
}

</mosaic_0001>

<llo_original>
// kernel: tpu_custom_call.1
$region0: #{tpu_custom_call.1}
  #allocation0 [shape = 'u32[]', space=smem, size = 0x4, offset = 0x4, fixed_abs, tag = 'smem constant byte address 0x4 - core index']
  #allocation1 [shape = 'u32[72,128]{1,0:T(1,128)}', space=vmem, size = 0x9000, scoped, tag = 'internal scratch']
  %s0 = inlined_call_operand.hbm [shape: f32[16,128], index: 0, kind: input, shape index: {}]
  %s1 = inlined_call_operand.hbm [shape: f32[16,128], index: 1, kind: input, shape index: {}]
  %s2 = inlined_call_operand.hbm [shape: f32[1,1], index: 2, kind: output, shape index: {}]
  %s3 = sld [smem:[#allocation0]]
  $region26: #{tpu_custom_call.1} parent=0
    _
  %s5 = ssub.s32 1, %s3
  %s6 = scalar_select 0, %s5, %s3
  $region1: #{tpu_custom_call.1} parent=0
    #allocation2 [shape = 'u8[8192]{0}', space=vmem, size = 0x2000, scoped, tag = 'input window, operand 0, single buffered']
    #allocation3 [shape = 's32[1]{0}', space=sflag, size = 0x4, scoped, tag = 'scoped memory for tpu_custom_call.1']
    #allocation4 [shape = 's32[1]{0}', space=sflag, size = 0x4, scoped, tag = 'scoped memory for tpu_custom_call.1']
    #allocation5 [shape = 'u8[8192]{0}', space=vmem, size = 0x2000, scoped, tag = 'input window, operand 1, single buffered']
    #allocation6 [shape = 's32[1]{0}', space=sflag, size = 0x4, scoped, tag = 'scoped memory for tpu_custom_call.1']
    #allocation7 [shape = 'u8[512]{0}', space=vmem, size = 0x400, scoped, tag = 'output window, operand 0, single buffered']
    %7 = vsyncpa [#allocation3], 0
    %8 = vsyncpa [#allocation6], 0
    %9 = vsyncpa [#allocation4], 0
    // Predicated region
    $region2: #{tpu_custom_call.1} parent=1 // pred_check
      _
    $region3: #{tpu_custom_call.1} parent=1 // pred_check_branch
      %11 = sbr.rel (0) target = $region5
    $region4: #{tpu_custom_call.1} parent=1 // pred_region
      %13 = vsyncadd [#allocation3], 0
      %s14 = sshll.u32 %s0, 4
      %s15 = int_to_ptr.hbm [resolvable:$true] %s14
      %s16 = sshll.u32 [#allocation2], 4
      %s17 = int_to_ptr.vmem [resolvable:$true] %s16
      %22 = dma.hbm_to_vmem [thread:$0]  %s15, 256, %s17, [#allocation3], 128, 128, 8
    $region5: #{tpu_custom_call.1} parent=1 // pred_fallthru
      _
    // Predicated region
    $region6: #{tpu_custom_call.1} parent=1 // pred_check
      _
    $region7: #{tpu_custom_call.1} parent=1 // pred_check_branch
      %24 = sbr.rel (0) target = $region9
    $region8: #{tpu_custom_call.1} parent=1 // pred_region
      %26 = vsyncadd [#allocation6], 0
      %s27 = sshll.u32 %s1, 4
      %s28 = int_to_ptr.hbm [resolvable:$true] %s27
      %s29 = sshll.u32 [#allocation5], 4
      %s30 = int_to_ptr.vmem [resolvable:$true] %s29
      %35 = dma.hbm_to_vmem [thread:$0]  %s28, 256, %s30, [#allocation6], 128, 128, 8
    $region9: #{tpu_custom_call.1} parent=1 // pred_fallthru
      _
    // Predicated region
    $region10: #{tpu_custom_call.1} parent=1 // pred_check
      _
    $region11: #{tpu_custom_call.1} parent=1 // pred_check_branch
      %37 = sbr.rel (0) target = $region13
    $region12: #{tpu_custom_call.1} parent=1 // pred_region
      %39 = dma.done [#allocation3], 256
    $region13: #{tpu_custom_call.1} parent=1 // pred_fallthru
      _
    // Predicated region
    $region14: #{tpu_custom_call.1} parent=1 // pred_check
      _
    $region15: #{tpu_custom_call.1} parent=1 // pred_check_branch
      %41 = sbr.rel (0) target = $region17
    $region16: #{tpu_custom_call.1} parent=1 // pred_region
      %43 = dma.done [#allocation6], 256
    $region17: #{tpu_custom_call.1} parent=1 // pred_fallthru
      _
    %v44 = vld [vmem:[#allocation2] sm:$0xff]
    %v45 = vld [vmem:[#allocation2 + $0x8] sm:$0xff]
    %v46 = vld [vmem:[#allocation5] sm:$0xff]
    %v47 = vld [vmem:[#allocation5 + $0x8] sm:$0xff]
    %v48 = vxor.u32 %v44, 2147483648
    %v49 = vxor.u32 %v45, 2147483648
    %v50 = vmul.f32 %v48, 1.442695
    %v51 = vpow.pop %v50
    %v52 = vmul.f32 %v49, 1.442695
    %v53 = vpow.pop %v52
    %v54 = vadd.f32 %v51, 1.0
    %v55 = vadd.f32 %v53, 1.0
    %v56 = vrcp.pop %v54
    %v57 = vmul.f32 %v54, %v56
    %v58 = vsub.f32 1.0, %v57
    %v59 = vmul.f32 %v56, %v58
    %v60 = vadd.f32 %v56, %v59
    %vm61 = vweird.f32 %v54
    %vm62 = vweird.f32 %v56
    %vm63 = vmor %vm61, %vm62
    %v64 = vsel %vm63, %v56, %v60
    %v65 = vand.u32 2147483647, %v54
    %vm66 = vcmp.eq.f32.partialorder %v65, 8.507059e+37
    %v67 = vand.u32 %v54, 2147483648
    %v68 = vor.u32 1.1754944e-38, %v67
    %v69 = vsel %vm66, %v68, %v64
    %v70 = vmul.f32 1.0, %v69
    %v71 = vrcp.pop %v55
    %v72 = vmul.f32 %v55, %v71
    %v73 = vsub.f32 1.0, %v72
    %v74 = vmul.f32 %v71, %v73
    %v75 = vadd.f32 %v71, %v74
    %vm76 = vweird.f32 %v55
    %vm77 = vweird.f32 %v71
    %vm78 = vmor %vm76, %vm77
    %v79 = vsel %vm78, %v71, %v75
    %v80 = vand.u32 2147483647, %v55
    %vm81 = vcmp.eq.f32.partialorder %v80, 8.507059e+37
    %v82 = vand.u32 %v55, 2147483648
    %v83 = vor.u32 1.1754944e-38, %v82
    %v84 = vsel %vm81, %v83, %v79
    %v85 = vmul.f32 1.0, %v84
    %v86 = vsub.f32 1.0, %v46
    %v87 = vsub.f32 1.0, %v47
    %v88 = vmul.f32 %v70, %v86
    %v89 = vmul.f32 %v85, %v87
    %v90 = vsub.f32 0.0, %v70
    %v91 = vsub.f32 0.0, %v85
    %v92 = vmul.f32 %v90, 1.442695
    %v93 = vpow.pop %v92
    %v94 = vmul.f32 %v91, 1.442695
    %v95 = vpow.pop %v94
    %v96 = vadd.f32 %v93, 1.0
    %v97 = vlog2.pop %v96
    %v98 = vmul.f32 %v97, 0.6931472
    %v99 = vmul.f32 -0.5, %v93
    %v100 = vadd.f32 %v99, 1.0
    %v101 = vmul.f32 %v100, %v93
    %v102 = vand.u32 2147483647, %v93
    %vm103 = vcmp.lt.f32.partialorder %v102, 0.0004427343
    %v104 = vsel %vm103, %v101, %v98
    %v105 = vadd.f32 %v95, 1.0
    %v106 = vlog2.pop %v105
    %v107 = vmul.f32 %v106, 0.6931472
    %v108 = vmul.f32 -0.5, %v95
    %v109 = vadd.f32 %v108, 1.0
    %v110 = vmul.f32 %v109, %v95
    %v111 = vand.u32 2147483647, %v95
    %vm112 = vcmp.lt.f32.partialorder %v111, 0.0004427343
    %v113 = vsel %vm112, %v110, %v107
    %v114 = vadd.f32 %v88, %v104
    %v115 = vadd.f32 %v89, %v113
    %v116 = vadd.f32 %v114, %v115
    %117 = vadd.xlane.f32.xlu0 %v116
    %v118 = vpop.xlane.xlu0 %117
    %v119 = vrot.slane %v118, 4
    %v120 = vadd.f32 %v118, %v119
    %v121 = vrot.slane %v120, 2
    %v122 = vadd.f32 %v120, %v121
    %v123 = vrot.slane %v122, 1
    %v124 = vadd.f32 %v122, %v123
    %s125 = vtos %v124
    %s126 = smul.f32 %s125, 0.00048828125
    %v127 = vstv %s126
    %vm128 = vcmask 0
    %129 = vst.msk [vmem:[#allocation7] sm:$0x1] %vm128, %v127
    // Predicated region
    $region18: #{tpu_custom_call.1} parent=1 // pred_check
      _
    $region19: #{tpu_custom_call.1} parent=1 // pred_check_branch
      %131 = sbr.rel (0) target = $region21
    $region20: #{tpu_custom_call.1} parent=1 // pred_region
      %133 = vsyncadd [#allocation4], 0
      %s135 = sshll.u32 [#allocation7], 4
      %s136 = int_to_ptr.vmem [resolvable:$true] %s135
      %s137 = sshll.u32 %s2, 4
      %s138 = int_to_ptr.hbm [resolvable:$true] %s137
      %140 = dma.vmem_to_hbm [thread:$0]  %s136, 16, %s138, [#allocation4]
    $region21: #{tpu_custom_call.1} parent=1 // pred_fallthru
      _
    // Predicated region
    $region22: #{tpu_custom_call.1} parent=1 // pred_check
      _
    $region23: #{tpu_custom_call.1} parent=1 // pred_check_branch
      %142 = sbr.rel (0) target = $region25
    $region24: #{tpu_custom_call.1} parent=1 // pred_region
      %144 = dma.done [#allocation4], 16
    $region25: #{tpu_custom_call.1} parent=1 // pred_fallthru
      _
    %145 = vsyncpa [#allocation3], 1
    %146 = vsyncpa [#allocation6], 1
    %147 = vsyncpa [#allocation4], 1

</llo_original>
